<compile_context>
chip_gen: v6e
topology: v6e:2x2x1
jax: 0.10.0
libtpu: 0.0.40
codegen_flags: <defaults>
</compile_context>

<pallas_src>
import jax
import jax.numpy as jnp
from jax import lax
from jax.experimental import pallas as pl
from jax.experimental.pallas import tpu as pltpu


def _round_up(x: int, m: int) -> int:
    return (x + m - 1) // m * m


def mf_kernel(ids_ref, table_t_ref, w_ref, b_ref, out_ref):
    """Fused gather + linear + square + sum, batch on the lane axis.

    ids_ref     : (1, tile_b)      int32   per-tile user ids (streamed)
    table_t_ref : (D, U_pad)       float32 user-embedding table, transposed (resident)
    w_ref       : (H, D)           float32 user_h1 weight (resident)
    b_ref       : (H, 1)           float32 user_h1 bias   (resident)
    out_ref     : (1, tile_b)      float32 scores (lane-dense store)
    """
    u_pad = table_t_ref.shape[1]
    tile_b = ids_ref.shape[1]

    # Per-user hidden activations on the resident params (tiny: (H, U_pad)).
    hu = jnp.dot(w_ref[...], table_t_ref[...],
                 preferred_element_type=jnp.float32,
                 precision=lax.Precision.HIGHEST)
    hu = hu + b_ref[...]                                        # (H, U_pad)

    # Exact one-hot gather of each id's column: onehot[u, j] = (u == ids[j]).
    ids = ids_ref[...]                                          # (1, tile_b)
    u_iota = lax.broadcasted_iota(jnp.int32, (u_pad, tile_b), 0)
    onehot = (u_iota == ids).astype(jnp.float32)                # (U_pad, tile_b)

    h = jnp.dot(hu, onehot,
                preferred_element_type=jnp.float32,
                precision=lax.Precision.HIGHEST)                # (H, tile_b)

    # user_h1 * item_h1 with item_h1 == user_h1  ->  sum of squares over H
    # (sublane reduce, lane-dense (1, tile_b) store).
    out_ref[...] = jnp.sum(h * h, axis=0, keepdims=True)


def init_params(key, n_users, n_items, latent_dim):
    """Deterministic parameter init matching the PyTorch module's shapes."""
    k_ue, k_ie, k_uw, k_ub, k_iw, k_ib = jax.random.split(key, 6)
    h = latent_dim // 2
    bound = 1.0 / (latent_dim ** 0.5)
    return {
        # nn.Embedding default init ~ N(0, 1)
        "user_emb": jax.random.normal(k_ue, (n_users, latent_dim), jnp.float32),
        "item_emb": jax.random.normal(k_ie, (n_items, latent_dim), jnp.float32),
        # nn.Linear default init ~ U(-1/sqrt(in), 1/sqrt(in)); weight stored (out, in)
        "user_h1_w": jax.random.uniform(k_uw, (h, latent_dim), jnp.float32, -bound, bound),
        "user_h1_b": jax.random.uniform(k_ub, (h,), jnp.float32, -bound, bound),
        # item_h1 linear exists in __init__ but is unused in forward (original bug);
        # kept for shape fidelity.
        "item_h1_w": jax.random.uniform(k_iw, (h, latent_dim), jnp.float32, -bound, bound),
        "item_h1_b": jax.random.uniform(k_ib, (h,), jnp.float32, -bound, bound),
    }


def vanilla_mf_forward(params, user_ids, item_ids, *, max_tile_b=2048):
    """user_ids, item_ids: int32 of shape (B, 1) (as the .squeeze(dim=1) implies).

    item_ids are accepted for signature fidelity but never touched: the item
    path in the original forward is dead (item_h1 is overwritten by user_h1).
    """
    del item_ids

    ids = user_ids.reshape(-1).astype(jnp.int32)            # (B,)
    b_sz = ids.shape[0]

    emb = params["user_emb"]                                 # (n_users, D)
    n_users, d = emb.shape
    w = params["user_h1_w"]                                  # (H, D)
    h_dim = w.shape[0]
    bias = params["user_h1_b"].reshape(h_dim, 1)             # (H, 1)

    # Lane-pad the user table to a multiple of 128 and transpose -> (D, U_pad),
    # so it sits lane-dense and VMEM-resident across all grid steps.
    u_pad = _round_up(n_users, 128)
    table_t = jnp.zeros((d, u_pad), jnp.float32).at[:, :n_users].set(emb.T)

    # Batch tiling on the lane axis: tile_b is a multiple of 128, and we aim
    # for >= 2 grid steps whenever the batch allows so v7x's two TensorCores
    # both get work ("parallel" grid axis).
    max_tile_b = max(128, _round_up(max_tile_b, 128))
    tile_b = min(max_tile_b, _round_up(pl.cdiv(b_sz, 2), 128))
    b_pad = _round_up(b_sz, tile_b)
    if b_pad != b_sz:
        ids = jnp.pad(ids, (0, b_pad - b_sz))                # pad with id 0 (in range)
    ids_2d = ids.reshape(1, b_pad)
    num_tiles = b_pad // tile_b

    out = pl.pallas_call(
        mf_kernel,
        out_shape=jax.ShapeDtypeStruct((1, b_pad), jnp.float32),
        grid=(num_tiles,),
        in_specs=[
            pl.BlockSpec((1, tile_b), lambda i: (0, i)),      # ids, streamed per tile
            pl.BlockSpec((d, u_pad), lambda i: (0, 0)),       # table^T, resident
            pl.BlockSpec((h_dim, d), lambda i: (0, 0)),       # W, resident
            pl.BlockSpec((h_dim, 1), lambda i: (0, 0)),       # bias, resident
        ],
        out_specs=pl.BlockSpec((1, tile_b), lambda i: (0, i)),
        compiler_params=pltpu.CompilerParams(
            dimension_semantics=("parallel",)),
    )(ids_2d, table_t, w, bias)

    return out[0, :b_sz]                                      # (B,)


def reference_forward(params, user_ids, item_ids):
    """Pure-JAX reference matching the PyTorch forward (eval mode)."""
    ue = params["user_emb"][user_ids.reshape(-1)]
    ie = params["item_emb"][item_ids.reshape(-1)]
    w = params["user_h1_w"]
    b = params["user_h1_b"]
    user_h1 = jnp.dot(ue, w.T, precision=lax.Precision.HIGHEST) + b
    _item_h1 = jnp.dot(ie, w.T, precision=lax.Precision.HIGHEST) + b  # dead, per original
    item_h1 = user_h1                                                 # overwritten, per original
    return jnp.sum(user_h1 * item_h1, axis=1)


if __name__ == "__main__":
    key = jax.random.PRNGKey(0)
    k_params, k_u, k_i, k_u2, k_i2 = jax.random.split(key, 5)

    n_users, n_items, latent_dim = 64, 48, 16
    params = init_params(k_params, n_users, n_items, latent_dim)

    # Small demo (single 128-wide tile, padded tail).
    batch = 8
    user_ids = jax.random.randint(k_u, (batch, 1), 0, n_users, dtype=jnp.int32)
    item_ids = jax.random.randint(k_i, (batch, 1), 0, n_items, dtype=jnp.int32)
    out = jax.block_until_ready(vanilla_mf_forward(params, user_ids, item_ids))
    ref = jax.block_until_ready(reference_forward(params, user_ids, item_ids))
    assert out.shape == (batch,)
    assert jnp.allclose(out, ref, atol=1e-4, rtol=1e-5)

    # Larger batch exercising the multi-tile grid (2 tiles of 256) + tail padding.
    batch2 = 300
    user_ids2 = jax.random.randint(k_u2, (batch2, 1), 0, n_users, dtype=jnp.int32)
    item_ids2 = jax.random.randint(k_i2, (batch2, 1), 0, n_items, dtype=jnp.int32)
    out2 = jax.block_until_ready(
        vanilla_mf_forward(params, user_ids2, item_ids2, max_tile_b=256))
    ref2 = jax.block_until_ready(reference_forward(params, user_ids2, item_ids2))
    assert out2.shape == (batch2,)
    assert jnp.allclose(out2, ref2, atol=1e-4, rtol=1e-5)

    print("KERNEL_OK")
</pallas_src>

<mosaic_0001>
module attributes {stable_mosaic.version = 11 : i64} {
  func.func @mf_kernel(%arg0: i32, %arg1: memref<1x128xi32, #tpu.memory_space<vmem>>, %arg2: memref<16x128xf32, #tpu.memory_space<vmem>>, %arg3: memref<8x16xf32, #tpu.memory_space<vmem>>, %arg4: memref<8x1xf32, #tpu.memory_space<vmem>>, %arg5: memref<1x128xf32, #tpu.memory_space<vmem>>) attributes {dimension_semantics = [#tpu.dimension_semantics<parallel>], iteration_bounds = array<i64: 1>, scalar_prefetch = 0 : i64, scratch_operands = 0 : i64, tpu.core_type = #tpu.core_type<tc>, window_params = [{transform_indices = @transform_0, window_bounds = array<i64: 1, 128>}, {pipeline_mode = #tpu.pipeline_mode<synchronous>, transform_indices = @transform_1, window_bounds = array<i64: 16, 128>}, {pipeline_mode = #tpu.pipeline_mode<synchronous>, transform_indices = @transform_2, window_bounds = array<i64: 8, 16>}, {pipeline_mode = #tpu.pipeline_mode<synchronous>, transform_indices = @transform_3, window_bounds = array<i64: 8, 1>}, {transform_indices = @transform_4, window_bounds = array<i64: 1, 128>}]} {
    %c0 = arith.constant 0 : index
    %c0_0 = arith.constant 0 : index
    %0 = vector.load %arg3[%c0, %c0_0] : memref<8x16xf32, #tpu.memory_space<vmem>>, vector<8x16xf32>
    %c0_1 = arith.constant 0 : index
    %c0_2 = arith.constant 0 : index
    %1 = vector.load %arg2[%c0_1, %c0_2] : memref<16x128xf32, #tpu.memory_space<vmem>>, vector<16x128xf32>
    %cst = arith.constant dense<0.000000e+00> : vector<8x128xf32>
    %2 = tpu.matmul %0, %1, %cst {dimension_numbers = #tpu.dot_dimension_numbers<[1], [0], [0], [1], [0, 0, 1, 1], [], []>, precision = #tpu.contract_precision<fp32>} : vector<8x16xf32>, vector<16x128xf32>, vector<8x128xf32> -> vector<8x128xf32>
    %c0_3 = arith.constant 0 : index
    %c0_4 = arith.constant 0 : index
    %3 = vector.load %arg4[%c0_3, %c0_4] : memref<8x1xf32, #tpu.memory_space<vmem>>, vector<8x1xf32>
    %4 = vector.broadcast %3 : vector<8x1xf32> to vector<8x128xf32>
    %5 = arith.addf %2, %4 : vector<8x128xf32>
    %c0_5 = arith.constant 0 : index
    %c0_6 = arith.constant 0 : index
    %6 = vector.load %arg1[%c0_5, %c0_6] : memref<1x128xi32, #tpu.memory_space<vmem>>, vector<1x128xi32>
    %7 = tpu.iota {dimensions = array<i32: 0>} : vector<128x128xi32>
    %8 = vector.broadcast %6 : vector<1x128xi32> to vector<128x128xi32>
    %9 = arith.cmpi eq, %7, %8 : vector<128x128xi32>
    %10 = arith.extui %9 : vector<128x128xi1> to vector<128x128xi32>
    %11 = arith.sitofp %10 : vector<128x128xi32> to vector<128x128xf32>
    %cst_7 = arith.constant dense<0.000000e+00> : vector<8x128xf32>
    %12 = tpu.matmul %5, %11, %cst_7 {dimension_numbers = #tpu.dot_dimension_numbers<[1], [0], [0], [1], [0, 0, 1, 1], [], []>, precision = #tpu.contract_precision<fp32>} : vector<8x128xf32>, vector<128x128xf32>, vector<8x128xf32> -> vector<8x128xf32>
    %13 = arith.mulf %12, %12 : vector<8x128xf32>
    %cst_8 = arith.constant dense<0.000000e+00> : vector<128xf32>
    %14 = vector.multi_reduction <add>, %13, %cst_8 [0] : vector<8x128xf32> to vector<128xf32>
    %15 = vector.shape_cast %14 : vector<128xf32> to vector<1x128xf32>
    %c0_9 = arith.constant 0 : index
    %c0_10 = arith.constant 0 : index
    %16 = vector.load %arg5[%c0_9, %c0_10] : memref<1x128xf32, #tpu.memory_space<vmem>>, vector<1x128xf32>
    tpu.vector_store %arg5[%c0_9, %c0_10], %15 {strides = array<i32>} : memref<1x128xf32, #tpu.memory_space<vmem>>, vector<1x128xf32>,
    return
  }
  func.func @transform_0(%arg0: i32) -> (i32, i32) {
    %c0_i32 = arith.constant 0 : i32
    %c0_i32_0 = arith.constant 0 : i32
    return %c0_i32, %arg0 : i32, i32
  }
  func.func @transform_1(%arg0: i32) -> (i32, i32) {
    %c0_i32 = arith.constant 0 : i32
    %c0_i32_0 = arith.constant 0 : i32
    %c0_i32_1 = arith.constant 0 : i32
    return %c0_i32, %c0_i32_0 : i32, i32
  }
  func.func @transform_2(%arg0: i32) -> (i32, i32) {
    %c0_i32 = arith.constant 0 : i32
    %c0_i32_0 = arith.constant 0 : i32
    %c0_i32_1 = arith.constant 0 : i32
    return %c0_i32, %c0_i32_0 : i32, i32
  }
  func.func @transform_3(%arg0: i32) -> (i32, i32) {
    %c0_i32 = arith.constant 0 : i32
    %c0_i32_0 = arith.constant 0 : i32
    %c0_i32_1 = arith.constant 0 : i32
    return %c0_i32, %c0_i32_0 : i32, i32
  }
  func.func @transform_4(%arg0: i32) -> (i32, i32) {
    %c0_i32 = arith.constant 0 : i32
    %c0_i32_0 = arith.constant 0 : i32
    return %c0_i32, %arg0 : i32, i32
  }
}

</mosaic_0001>

<llo_original>
// kernel: tpu_custom_call.1
$region0: #{tpu_custom_call.1}
  #allocation0 [shape = 'u32[]', space=smem, size = 0x4, offset = 0x4, fixed_abs, tag = 'smem constant byte address 0x4 - core index']
  #allocation1 [shape = 'u32[144,128]{1,0:T(1,128)}', space=vmem, size = 0x12000, scoped, tag = 'internal scratch']
  %s0 = inlined_call_operand.vmem [shape: s32[1,128], index: 0, kind: input, shape index: {}]
  %s1 = inlined_call_operand.hbm [shape: f32[16,128], index: 1, kind: input, shape index: {}]
  %s2 = inlined_call_operand.vmem [shape: f32[8,16], index: 2, kind: input, shape index: {}]
  %s3 = inlined_call_operand.vmem [shape: f32[8,1], index: 3, kind: input, shape index: {}]
  %s4 = inlined_call_operand.hbm [shape: f32[1,128], index: 4, kind: output, shape index: {}]
  %s5 = sld [smem:[#allocation0]]
  $region30: #{tpu_custom_call.1} parent=0
    _
  %s7 = ssub.s32 1, %s5
  %s8 = scalar_select 0, %s7, %s5
  $region1: #{tpu_custom_call.1} parent=0
    #allocation2 [shape = 'u8[8192]{0}', space=vmem, size = 0x2000, scoped, tag = 'input window, operand 1, single buffered']
    #allocation3 [shape = 's32[1]{0}', space=sflag, size = 0x4, scoped, tag = 'scoped memory for tpu_custom_call.1']
    #allocation4 [shape = 's32[1]{0}', space=sflag, size = 0x4, scoped, tag = 'scoped memory for tpu_custom_call.1']
    #allocation5 [shape = 'u8[512]{0}', space=vmem, size = 0x400, scoped, tag = 'output window, operand 0, single buffered']
    %9 = vsyncpa [#allocation3], 0
    %10 = vsyncpa [#allocation4], 0
    // Predicated region
    $region2: #{tpu_custom_call.1} parent=1 // pred_check
      _
    $region3: #{tpu_custom_call.1} parent=1 // pred_check_branch
      %12 = sbr.rel (0) target = $region5
    $region4: #{tpu_custom_call.1} parent=1 // pred_region
      _
    $region5: #{tpu_custom_call.1} parent=1 // pred_fallthru
      _
    // Predicated region
    $region6: #{tpu_custom_call.1} parent=1 // pred_check
      _
    $region7: #{tpu_custom_call.1} parent=1 // pred_check_branch
      %14 = sbr.rel (0) target = $region9
    $region8: #{tpu_custom_call.1} parent=1 // pred_region
      %s16 = ssub.s32 256, 256
      %17 = vsyncadd [#allocation3], %s16
      %s18 = sshll.u32 [#allocation2], 4
      %s19 = int_to_ptr.vmem [resolvable:$true] %s18
      %24 = dma.hbm_to_vmem [thread:$0]  %s1, 256, %s19, [#allocation3], 128, 128, 8
    $region9: #{tpu_custom_call.1} parent=1 // pred_fallthru
      _
    // Predicated region
    $region10: #{tpu_custom_call.1} parent=1 // pred_check
      _
    $region11: #{tpu_custom_call.1} parent=1 // pred_check_branch
      %26 = sbr.rel (0) target = $region13
    $region12: #{tpu_custom_call.1} parent=1 // pred_region
      _
    $region13: #{tpu_custom_call.1} parent=1 // pred_fallthru
      _
    // Predicated region
    $region14: #{tpu_custom_call.1} parent=1 // pred_check
      _
    $region15: #{tpu_custom_call.1} parent=1 // pred_check_branch
      %28 = sbr.rel (0) target = $region17
    $region16: #{tpu_custom_call.1} parent=1 // pred_region
      _
    $region17: #{tpu_custom_call.1} parent=1 // pred_fallthru
      _
    // Predicated region
    $region18: #{tpu_custom_call.1} parent=1 // pred_check
      _
    $region19: #{tpu_custom_call.1} parent=1 // pred_check_branch
      %30 = sbr.rel (0) target = $region21
    $region20: #{tpu_custom_call.1} parent=1 // pred_region
      %31 = dma.done [#allocation3], 256
    $region21: #{tpu_custom_call.1} parent=1 // pred_fallthru
      _
    %v32 = vld [vmem:[%s2] sm:$0xff]
    %v33 = vld [vmem:[#allocation2] sm:$0xff]
    %v34 = vld [vmem:[#allocation2 + $0x8] sm:$0xff]
    %v35 = vld [vmem:[%s3] sm:$0xff]
    %37 = vset.pattern.permute.xlu0 0
    %38 = vperm.xlu0 %37, %v35
    %v39 = vpop.permute.xlu0 %38
    %vm41 = vcmask 130048
    %v43 = vsel %vm41, %v32, 0
    %45 = vmatprep.subr.mxu0 0.0
    %46 = vmatpush1.msra.mxu0 0.0
    %47 = vmatprep.subr.mxu0 0.0
    %48 = vmatpush1.msra.mxu0 0.0
    %49 = vmatprep.subr.mxu0 0.0
    %50 = vmatpush1.msra.mxu0 0.0
    %51 = vmatprep.subr.mxu0 0.0
    %52 = vmatpush1.msra.mxu0 0.0
    %53 = vmatprep.subr.mxu0 0.0
    %54 = vmatpush1.msra.mxu0 0.0
    %55 = vmatprep.subr.mxu0 0.0
    %56 = vmatpush1.msra.mxu0 0.0
    %57 = vmatprep.subr.mxu0 0.0
    %58 = vmatpush1.msra.mxu0 0.0
    %59 = vmatprep.subr.mxu0 0.0
    %60 = vmatpush1.msra.mxu0 0.0
    %61 = vmatprep.subr.mxu0 0.0
    %62 = vmatpush1.msra.mxu0 0.0
    %63 = vmatprep.subr.mxu0 0.0
    %64 = vmatpush1.msra.mxu0 0.0
    %65 = vmatprep.subr.mxu0 0.0
    %66 = vmatpush1.msra.mxu0 0.0
    %67 = vmatprep.subr.mxu0 0.0
    %68 = vmatpush1.msra.mxu0 0.0
    %69 = vmatprep.subr.mxu0 0.0
    %70 = vmatpush1.msra.mxu0 0.0
    %71 = vmatprep.subr.mxu0 0.0
    %72 = vmatpush1.msra.mxu0 0.0
    %73 = vmatprep.subr.mxu0 0.0
    %v74 = vand.u32 %v34, 4294901760
    %75 = vmatpush1.msra.mxu0 %v74
    %76 = vmatprep.subr.mxu0 0.0
    %v77 = vand.u32 %v33, 4294901760
    %78 = vmatpush1.msra.mxu0 %v77
    %79 = vmatprep.subr.mxu0 0.0
    %80 = vmatpush2.msra.mxu0 0.0
    %81 = vmatprep.subr.mxu0 0.0
    %82 = vmatpush2.msra.mxu0 0.0
    %83 = vmatprep.subr.mxu0 0.0
    %84 = vmatpush2.msra.mxu0 0.0
    %85 = vmatprep.subr.mxu0 0.0
    %86 = vmatpush2.msra.mxu0 0.0
    %87 = vmatprep.subr.mxu0 0.0
    %88 = vmatpush2.msra.mxu0 0.0
    %89 = vmatprep.subr.mxu0 0.0
    %90 = vmatpush2.msra.mxu0 0.0
    %91 = vmatprep.subr.mxu0 0.0
    %92 = vmatpush2.msra.mxu0 0.0
    %93 = vmatprep.subr.mxu0 0.0
    %94 = vmatpush2.msra.mxu0 0.0
    %95 = vmatprep.subr.mxu0 0.0
    %96 = vmatpush2.msra.mxu0 0.0
    %97 = vmatprep.subr.mxu0 0.0
    %98 = vmatpush2.msra.mxu0 0.0
    %99 = vmatprep.subr.mxu0 0.0
    %100 = vmatpush2.msra.mxu0 0.0
    %101 = vmatprep.subr.mxu0 0.0
    %102 = vmatpush2.msra.mxu0 0.0
    %103 = vmatprep.subr.mxu0 0.0
    %104 = vmatpush2.msra.mxu0 0.0
    %105 = vmatprep.subr.mxu0 0.0
    %106 = vmatpush2.msra.mxu0 0.0
    %107 = vmatprep.subr.mxu0 0.0
    %108 = vmatpush2.msra.mxu0 0.0
    %109 = vmatprep.subr.mxu0 0.0
    %110 = vmatpush2.msra.mxu0 0.0
    %111 = vmatprep.mubr.f32.mxu0 0.0
    %v112 = vand.u32 %v43, 4294901760
    %v113 = vsub.f32 %v43, %v112
    %v114 = vand.u32 %v113, 4294901760
    %v115 = vsub.f32 %v113, %v114
    %v116 = vand.u32 %v115, 4294901760
    %117 = vmatmul.mubr.f32.gmra.mxu0 %v116
    %v118 = vpop.f32.mrf.mxu0
    %v119 = vadd.f32 %v39, %v118
    %v120 = vpop.f32.mrf.mxu0
    %121 = vdwg.mxu0
    %122 = vmatprep.subr.mxu0 0.0
    %123 = vmatpush1.msra.mxu0 0.0
    %124 = vmatprep.subr.mxu0 0.0
    %125 = vmatpush1.msra.mxu0 0.0
    %126 = vmatprep.subr.mxu0 0.0
    %127 = vmatpush1.msra.mxu0 0.0
    %128 = vmatprep.subr.mxu0 0.0
    %129 = vmatpush1.msra.mxu0 0.0
    %130 = vmatprep.subr.mxu0 0.0
    %131 = vmatpush1.msra.mxu0 0.0
    %132 = vmatprep.subr.mxu0 0.0
    %133 = vmatpush1.msra.mxu0 0.0
    %134 = vmatprep.subr.mxu0 0.0
    %135 = vmatpush1.msra.mxu0 0.0
    %136 = vmatprep.subr.mxu0 0.0
    %137 = vmatpush1.msra.mxu0 0.0
    %138 = vmatprep.subr.mxu0 0.0
    %139 = vmatpush1.msra.mxu0 0.0
    %140 = vmatprep.subr.mxu0 0.0
    %141 = vmatpush1.msra.mxu0 0.0
    %142 = vmatprep.subr.mxu0 0.0
    %143 = vmatpush1.msra.mxu0 0.0
    %144 = vmatprep.subr.mxu0 0.0
    %145 = vmatpush1.msra.mxu0 0.0
    %146 = vmatprep.subr.mxu0 0.0
    %147 = vmatpush1.msra.mxu0 0.0
    %148 = vmatprep.subr.mxu0 0.0
    %149 = vmatpush1.msra.mxu0 0.0
    %150 = vmatprep.subr.mxu0 0.0
    %v151 = vand.u32 %v34, 4294901760
    %v152 = vsub.f32 %v34, %v151
    %v153 = vand.u32 %v152, 4294901760
    %v154 = vsub.f32 %v152, %v153
    %v155 = vand.u32 %v154, 4294901760
    %156 = vmatpush1.msra.mxu0 %v155
    %157 = vmatprep.subr.mxu0 0.0
    %v158 = vand.u32 %v33, 4294901760
    %v159 = vsub.f32 %v33, %v158
    %v160 = vand.u32 %v159, 4294901760
    %v161 = vsub.f32 %v159, %v160
    %v162 = vand.u32 %v161, 4294901760
    %163 = vmatpush1.msra.mxu0 %v162
    %164 = vmatprep.subr.mxu0 0.0
    %165 = vmatpush2.msra.mxu0 0.0
    %166 = vmatprep.subr.mxu0 0.0
    %167 = vmatpush2.msra.mxu0 0.0
    %168 = vmatprep.subr.mxu0 0.0
    %169 = vmatpush2.msra.mxu0 0.0
    %170 = vmatprep.subr.mxu0 0.0
    %171 = vmatpush2.msra.mxu0 0.0
    %172 = vmatprep.subr.mxu0 0.0
    %173 = vmatpush2.msra.mxu0 0.0
    %174 = vmatprep.subr.mxu0 0.0
    %175 = vmatpush2.msra.mxu0 0.0
    %176 = vmatprep.subr.mxu0 0.0
    %177 = vmatpush2.msra.mxu0 0.0
    %178 = vmatprep.subr.mxu0 0.0
    %179 = vmatpush2.msra.mxu0 0.0
    %180 = vmatprep.subr.mxu0 0.0
    %181 = vmatpush2.msra.mxu0 0.0
    %182 = vmatprep.subr.mxu0 0.0
    %183 = vmatpush2.msra.mxu0 0.0
    %184 = vmatprep.subr.mxu0 0.0
    %185 = vmatpush2.msra.mxu0 0.0
    %186 = vmatprep.subr.mxu0 0.0
    %187 = vmatpush2.msra.mxu0 0.0
    %188 = vmatprep.subr.mxu0 0.0
    %189 = vmatpush2.msra.mxu0 0.0
    %190 = vmatprep.subr.mxu0 0.0
    %191 = vmatpush2.msra.mxu0 0.0
    %192 = vmatprep.subr.mxu0 0.0
    %193 = vmatpush2.msra.mxu0 0.0
    %194 = vmatprep.subr.mxu0 0.0
    %195 = vmatpush2.msra.mxu0 0.0
    %196 = vmatprep.mubr.f32.mxu0 0.0
    %v197 = vand.u32 %v43, 4294901760
    %198 = vmatmul.mubr.f32.gmra.mxu0 %v197
    %v199 = vpop.f32.mrf.mxu0
    %v200 = vadd.f32 %v119, %v199
    %v201 = vpop.f32.mrf.mxu0
    %202 = vdwg.mxu0
    %203 = vmatprep.subr.mxu0 0.0
    %204 = vmatpush1.msra.mxu0 0.0
    %205 = vmatprep.subr.mxu0 0.0
    %206 = vmatpush1.msra.mxu0 0.0
    %207 = vmatprep.subr.mxu0 0.0
    %208 = vmatpush1.msra.mxu0 0.0
    %209 = vmatprep.subr.mxu0 0.0
    %210 = vmatpush1.msra.mxu0 0.0
    %211 = vmatprep.subr.mxu0 0.0
    %212 = vmatpush1.msra.mxu0 0.0
    %213 = vmatprep.subr.mxu0 0.0
    %214 = vmatpush1.msra.mxu0 0.0
    %215 = vmatprep.subr.mxu0 0.0
    %216 = vmatpush1.msra.mxu0 0.0
    %217 = vmatprep.subr.mxu0 0.0
    %218 = vmatpush1.msra.mxu0 0.0
    %219 = vmatprep.subr.mxu0 0.0
    %220 = vmatpush1.msra.mxu0 0.0
    %221 = vmatprep.subr.mxu0 0.0
    %222 = vmatpush1.msra.mxu0 0.0
    %223 = vmatprep.subr.mxu0 0.0
    %224 = vmatpush1.msra.mxu0 0.0
    %225 = vmatprep.subr.mxu0 0.0
    %226 = vmatpush1.msra.mxu0 0.0
    %227 = vmatprep.subr.mxu0 0.0
    %228 = vmatpush1.msra.mxu0 0.0
    %229 = vmatprep.subr.mxu0 0.0
    %230 = vmatpush1.msra.mxu0 0.0
    %231 = vmatprep.subr.mxu0 0.0
    %v232 = vand.u32 %v34, 4294901760
    %v233 = vsub.f32 %v34, %v232
    %234 = vmatpush1.msra.mxu0 %v233
    %235 = vmatprep.subr.mxu0 0.0
    %v236 = vand.u32 %v33, 4294901760
    %v237 = vsub.f32 %v33, %v236
    %238 = vmatpush1.msra.mxu0 %v237
    %239 = vmatprep.subr.mxu0 0.0
    %240 = vmatpush2.msra.mxu0 0.0
    %241 = vmatprep.subr.mxu0 0.0
    %242 = vmatpush2.msra.mxu0 0.0
    %243 = vmatprep.subr.mxu0 0.0
    %244 = vmatpush2.msra.mxu0 0.0
    %245 = vmatprep.subr.mxu0 0.0
    %246 = vmatpush2.msra.mxu0 0.0
    %247 = vmatprep.subr.mxu0 0.0
    %248 = vmatpush2.msra.mxu0 0.0
    %249 = vmatprep.subr.mxu0 0.0
    %250 = vmatpush2.msra.mxu0 0.0
    %251 = vmatprep.subr.mxu0 0.0
    %252 = vmatpush2.msra.mxu0 0.0
    %253 = vmatprep.subr.mxu0 0.0
    %254 = vmatpush2.msra.mxu0 0.0
    %255 = vmatprep.subr.mxu0 0.0
    %256 = vmatpush2.msra.mxu0 0.0
    %257 = vmatprep.subr.mxu0 0.0
    %258 = vmatpush2.msra.mxu0 0.0
    %259 = vmatprep.subr.mxu0 0.0
    %260 = vmatpush2.msra.mxu0 0.0
    %261 = vmatprep.subr.mxu0 0.0
    %262 = vmatpush2.msra.mxu0 0.0
    %263 = vmatprep.subr.mxu0 0.0
    %264 = vmatpush2.msra.mxu0 0.0
    %265 = vmatprep.subr.mxu0 0.0
    %266 = vmatpush2.msra.mxu0 0.0
    %267 = vmatprep.subr.mxu0 0.0
    %268 = vmatpush2.msra.mxu0 0.0
    %269 = vmatprep.subr.mxu0 0.0
    %270 = vmatpush2.msra.mxu0 0.0
    %271 = vmatprep.mubr.f32.mxu0 0.0
    %v272 = vand.u32 %v43, 4294901760
    %v273 = vsub.f32 %v43, %v272
    %274 = vmatmul.mubr.f32.gmra.mxu0 %v273
    %v275 = vpop.f32.mrf.mxu0
    %v276 = vadd.f32 %v200, %v275
    %v277 = vpop.f32.mrf.mxu0
    %278 = vdwg.mxu0
    %279 = vmatprep.subr.mxu0 0.0
    %280 = vmatpush1.msra.mxu0 0.0
    %281 = vmatprep.subr.mxu0 0.0
    %282 = vmatpush1.msra.mxu0 0.0
    %283 = vmatprep.subr.mxu0 0.0
    %284 = vmatpush1.msra.mxu0 0.0
    %285 = vmatprep.subr.mxu0 0.0
    %286 = vmatpush1.msra.mxu0 0.0
    %287 = vmatprep.subr.mxu0 0.0
    %288 = vmatpush1.msra.mxu0 0.0
    %289 = vmatprep.subr.mxu0 0.0
    %290 = vmatpush1.msra.mxu0 0.0
    %291 = vmatprep.subr.mxu0 0.0
    %292 = vmatpush1.msra.mxu0 0.0
    %293 = vmatprep.subr.mxu0 0.0
    %294 = vmatpush1.msra.mxu0 0.0
    %295 = vmatprep.subr.mxu0 0.0
    %296 = vmatpush1.msra.mxu0 0.0
    %297 = vmatprep.subr.mxu0 0.0
    %298 = vmatpush1.msra.mxu0 0.0
    %299 = vmatprep.subr.mxu0 0.0
    %300 = vmatpush1.msra.mxu0 0.0
    %301 = vmatprep.subr.mxu0 0.0
    %302 = vmatpush1.msra.mxu0 0.0
    %303 = vmatprep.subr.mxu0 0.0
    %304 = vmatpush1.msra.mxu0 0.0
    %305 = vmatprep.subr.mxu0 0.0
    %306 = vmatpush1.msra.mxu0 0.0
    %307 = vmatprep.subr.mxu0 0.0
    %v308 = vand.u32 %v34, 4294901760
    %309 = vmatpush1.msra.mxu0 %v308
    %310 = vmatprep.subr.mxu0 0.0
    %v311 = vand.u32 %v33, 4294901760
    %312 = vmatpush1.msra.mxu0 %v311
    %313 = vmatprep.subr.mxu0 0.0
    %314 = vmatpush2.msra.mxu0 0.0
    %315 = vmatprep.subr.mxu0 0.0
    %316 = vmatpush2.msra.mxu0 0.0
    %317 = vmatprep.subr.mxu0 0.0
    %318 = vmatpush2.msra.mxu0 0.0
    %319 = vmatprep.subr.mxu0 0.0
    %320 = vmatpush2.msra.mxu0 0.0
    %321 = vmatprep.subr.mxu0 0.0
    %322 = vmatpush2.msra.mxu0 0.0
    %323 = vmatprep.subr.mxu0 0.0
    %324 = vmatpush2.msra.mxu0 0.0
    %325 = vmatprep.subr.mxu0 0.0
    %326 = vmatpush2.msra.mxu0 0.0
    %327 = vmatprep.subr.mxu0 0.0
    %328 = vmatpush2.msra.mxu0 0.0
    %329 = vmatprep.subr.mxu0 0.0
    %330 = vmatpush2.msra.mxu0 0.0
    %331 = vmatprep.subr.mxu0 0.0
    %332 = vmatpush2.msra.mxu0 0.0
    %333 = vmatprep.subr.mxu0 0.0
    %334 = vmatpush2.msra.mxu0 0.0
    %335 = vmatprep.subr.mxu0 0.0
    %336 = vmatpush2.msra.mxu0 0.0
    %337 = vmatprep.subr.mxu0 0.0
    %338 = vmatpush2.msra.mxu0 0.0
    %339 = vmatprep.subr.mxu0 0.0
    %340 = vmatpush2.msra.mxu0 0.0
    %341 = vmatprep.subr.mxu0 0.0
    %342 = vmatpush2.msra.mxu0 0.0
    %343 = vmatprep.subr.mxu0 0.0
    %344 = vmatpush2.msra.mxu0 0.0
    %345 = vmatprep.mubr.f32.mxu0 0.0
    %v346 = vand.u32 %v43, 4294901760
    %v347 = vsub.f32 %v43, %v346
    %v348 = vand.u32 %v347, 4294901760
    %349 = vmatmul.mubr.f32.gmra.mxu0 %v348
    %v350 = vpop.f32.mrf.mxu0
    %v351 = vadd.f32 %v276, %v350
    %v352 = vpop.f32.mrf.mxu0
    %353 = vdwg.mxu0
    %354 = vmatprep.subr.mxu0 0.0
    %355 = vmatpush1.msra.mxu0 0.0
    %356 = vmatprep.subr.mxu0 0.0
    %357 = vmatpush1.msra.mxu0 0.0
    %358 = vmatprep.subr.mxu0 0.0
    %359 = vmatpush1.msra.mxu0 0.0
    %360 = vmatprep.subr.mxu0 0.0
    %361 = vmatpush1.msra.mxu0 0.0
    %362 = vmatprep.subr.mxu0 0.0
    %363 = vmatpush1.msra.mxu0 0.0
    %364 = vmatprep.subr.mxu0 0.0
    %365 = vmatpush1.msra.mxu0 0.0
    %366 = vmatprep.subr.mxu0 0.0
    %367 = vmatpush1.msra.mxu0 0.0
    %368 = vmatprep.subr.mxu0 0.0
    %369 = vmatpush1.msra.mxu0 0.0
    %370 = vmatprep.subr.mxu0 0.0
    %371 = vmatpush1.msra.mxu0 0.0
    %372 = vmatprep.subr.mxu0 0.0
    %373 = vmatpush1.msra.mxu0 0.0
    %374 = vmatprep.subr.mxu0 0.0
    %375 = vmatpush1.msra.mxu0 0.0
    %376 = vmatprep.subr.mxu0 0.0
    %377 = vmatpush1.msra.mxu0 0.0
    %378 = vmatprep.subr.mxu0 0.0
    %379 = vmatpush1.msra.mxu0 0.0
    %380 = vmatprep.subr.mxu0 0.0
    %381 = vmatpush1.msra.mxu0 0.0
    %382 = vmatprep.subr.mxu0 0.0
    %v383 = vand.u32 %v34, 4294901760
    %v384 = vsub.f32 %v34, %v383
    %v385 = vand.u32 %v384, 4294901760
    %386 = vmatpush1.msra.mxu0 %v385
    %387 = vmatprep.subr.mxu0 0.0
    %v388 = vand.u32 %v33, 4294901760
    %v389 = vsub.f32 %v33, %v388
    %v390 = vand.u32 %v389, 4294901760
    %391 = vmatpush1.msra.mxu0 %v390
    %392 = vmatprep.subr.mxu0 0.0
    %393 = vmatpush2.msra.mxu0 0.0
    %394 = vmatprep.subr.mxu0 0.0
    %395 = vmatpush2.msra.mxu0 0.0
    %396 = vmatprep.subr.mxu0 0.0
    %397 = vmatpush2.msra.mxu0 0.0
    %398 = vmatprep.subr.mxu0 0.0
    %399 = vmatpush2.msra.mxu0 0.0
    %400 = vmatprep.subr.mxu0 0.0
    %401 = vmatpush2.msra.mxu0 0.0
    %402 = vmatprep.subr.mxu0 0.0
    %403 = vmatpush2.msra.mxu0 0.0
    %404 = vmatprep.subr.mxu0 0.0
    %405 = vmatpush2.msra.mxu0 0.0
    %406 = vmatprep.subr.mxu0 0.0
    %407 = vmatpush2.msra.mxu0 0.0
    %408 = vmatprep.subr.mxu0 0.0
    %409 = vmatpush2.msra.mxu0 0.0
    %410 = vmatprep.subr.mxu0 0.0
    %411 = vmatpush2.msra.mxu0 0.0
    %412 = vmatprep.subr.mxu0 0.0
    %413 = vmatpush2.msra.mxu0 0.0
    %414 = vmatprep.subr.mxu0 0.0
    %415 = vmatpush2.msra.mxu0 0.0
    %416 = vmatprep.subr.mxu0 0.0
    %417 = vmatpush2.msra.mxu0 0.0
    %418 = vmatprep.subr.mxu0 0.0
    %419 = vmatpush2.msra.mxu0 0.0
    %420 = vmatprep.subr.mxu0 0.0
    %421 = vmatpush2.msra.mxu0 0.0
    %422 = vmatprep.subr.mxu0 0.0
    %423 = vmatpush2.msra.mxu0 0.0
    %424 = vmatprep.mubr.f32.mxu0 0.0
    %v425 = vand.u32 %v43, 4294901760
    %426 = vmatmul.mubr.f32.gmra.mxu0 %v425
    %v427 = vpop.f32.mrf.mxu0
    %v428 = vadd.f32 %v351, %v427
    %v429 = vpop.f32.mrf.mxu0
    %430 = vdwg.mxu0
    %431 = vmatprep.subr.mxu0 0.0
    %432 = vmatpush1.msra.mxu0 0.0
    %433 = vmatprep.subr.mxu0 0.0
    %434 = vmatpush1.msra.mxu0 0.0
    %435 = vmatprep.subr.mxu0 0.0
    %436 = vmatpush1.msra.mxu0 0.0
    %437 = vmatprep.subr.mxu0 0.0
    %438 = vmatpush1.msra.mxu0 0.0
    %439 = vmatprep.subr.mxu0 0.0
    %440 = vmatpush1.msra.mxu0 0.0
    %441 = vmatprep.subr.mxu0 0.0
    %442 = vmatpush1.msra.mxu0 0.0
    %443 = vmatprep.subr.mxu0 0.0
    %444 = vmatpush1.msra.mxu0 0.0
    %445 = vmatprep.subr.mxu0 0.0
    %446 = vmatpush1.msra.mxu0 0.0
    %447 = vmatprep.subr.mxu0 0.0
    %448 = vmatpush1.msra.mxu0 0.0
    %449 = vmatprep.subr.mxu0 0.0
    %450 = vmatpush1.msra.mxu0 0.0
    %451 = vmatprep.subr.mxu0 0.0
    %452 = vmatpush1.msra.mxu0 0.0
    %453 = vmatprep.subr.mxu0 0.0
    %454 = vmatpush1.msra.mxu0 0.0
    %455 = vmatprep.subr.mxu0 0.0
    %456 = vmatpush1.msra.mxu0 0.0
    %457 = vmatprep.subr.mxu0 0.0
    %458 = vmatpush1.msra.mxu0 0.0
    %459 = vmatprep.subr.mxu0 0.0
    %v460 = vand.u32 %v34, 4294901760
    %461 = vmatpush1.msra.mxu0 %v460
    %462 = vmatprep.subr.mxu0 0.0
    %v463 = vand.u32 %v33, 4294901760
    %464 = vmatpush1.msra.mxu0 %v463
    %465 = vmatprep.subr.mxu0 0.0
    %466 = vmatpush2.msra.mxu0 0.0
    %467 = vmatprep.subr.mxu0 0.0
    %468 = vmatpush2.msra.mxu0 0.0
    %469 = vmatprep.subr.mxu0 0.0
    %470 = vmatpush2.msra.mxu0 0.0
    %471 = vmatprep.subr.mxu0 0.0
    %472 = vmatpush2.msra.mxu0 0.0
    %473 = vmatprep.subr.mxu0 0.0
    %474 = vmatpush2.msra.mxu0 0.0
    %475 = vmatprep.subr.mxu0 0.0
    %476 = vmatpush2.msra.mxu0 0.0
    %477 = vmatprep.subr.mxu0 0.0
    %478 = vmatpush2.msra.mxu0 0.0
    %479 = vmatprep.subr.mxu0 0.0
    %480 = vmatpush2.msra.mxu0 0.0
    %481 = vmatprep.subr.mxu0 0.0
    %482 = vmatpush2.msra.mxu0 0.0
    %483 = vmatprep.subr.mxu0 0.0
    %484 = vmatpush2.msra.mxu0 0.0
    %485 = vmatprep.subr.mxu0 0.0
    %486 = vmatpush2.msra.mxu0 0.0
    %487 = vmatprep.subr.mxu0 0.0
    %488 = vmatpush2.msra.mxu0 0.0
    %489 = vmatprep.subr.mxu0 0.0
    %490 = vmatpush2.msra.mxu0 0.0
    %491 = vmatprep.subr.mxu0 0.0
    %492 = vmatpush2.msra.mxu0 0.0
    %493 = vmatprep.subr.mxu0 0.0
    %494 = vmatpush2.msra.mxu0 0.0
    %495 = vmatprep.subr.mxu0 0.0
    %496 = vmatpush2.msra.mxu0 0.0
    %497 = vmatprep.mubr.f32.mxu0 0.0
    %v498 = vand.u32 %v43, 4294901760
    %499 = vmatmul.mubr.f32.gmra.mxu0 %v498
    %v500 = vpop.f32.mrf.mxu0
    %v501 = vadd.f32 %v428, %v500
    %v502 = vpop.f32.mrf.mxu0
    %503 = vdwg.mxu0
    %v504 = vld [vmem:[%s0] sm:$0x1]
    %v505 = vlaneseq
    %v506 = vshrl.u32 %v505, 7
    %v507 = vadd.s32 %v506, 8
    %v508 = vadd.s32 %v506, 16
    %v509 = vadd.s32 %v506, 24
    %v510 = vadd.s32 %v506, 32
    %v511 = vadd.s32 %v506, 40
    %v512 = vadd.s32 %v506, 48
    %v513 = vadd.s32 %v506, 56
    %v514 = vadd.s32 %v506, 64
    %v515 = vadd.s32 %v506, 72
    %v516 = vadd.s32 %v506, 80
    %v517 = vadd.s32 %v506, 88
    %v518 = vadd.s32 %v506, 96
    %v519 = vadd.s32 %v506, 104
    %v520 = vadd.s32 %v506, 112
    %v521 = vadd.s32 %v506, 120
    %v522 = vlaneseq
    %v523 = vshrl.u32 %v522, 7
    %v524 = vsub.s32 0, %v523
    %v525 = vrot.slane %v504, %v524
    %vm526 = vcmp.eq.s32.totalorder %v506, %v525
    %vm527 = vcmp.eq.s32.totalorder %v507, %v525
    %vm528 = vcmp.eq.s32.totalorder %v508, %v525
    %vm529 = vcmp.eq.s32.totalorder %v509, %v525
    %vm530 = vcmp.eq.s32.totalorder %v510, %v525
    %vm531 = vcmp.eq.s32.totalorder %v511, %v525
    %vm532 = vcmp.eq.s32.totalorder %v512, %v525
    %vm533 = vcmp.eq.s32.totalorder %v513, %v525
    %vm534 = vcmp.eq.s32.totalorder %v514, %v525
    %vm535 = vcmp.eq.s32.totalorder %v515, %v525
    %vm536 = vcmp.eq.s32.totalorder %v516, %v525
    %vm537 = vcmp.eq.s32.totalorder %v517, %v525
    %vm538 = vcmp.eq.s32.totalorder %v518, %v525
    %vm539 = vcmp.eq.s32.totalorder %v519, %v525
    %vm540 = vcmp.eq.s32.totalorder %v520, %v525
    %vm541 = vcmp.eq.s32.totalorder %v521, %v525
    %v542 = vsel %vm526, 1, 0
    %v543 = vsel %vm527, 1, 0
    %v544 = vsel %vm528, 1, 0
    %v545 = vsel %vm529, 1, 0
    %v546 = vsel %vm530, 1, 0
    %v547 = vsel %vm531, 1, 0
    %v548 = vsel %vm532, 1, 0
    %v549 = vsel %vm533, 1, 0
    %v550 = vsel %vm534, 1, 0
    %v551 = vsel %vm535, 1, 0
    %v552 = vsel %vm536, 1, 0
    %v553 = vsel %vm537, 1, 0
    %v554 = vsel %vm538, 1, 0
    %v555 = vsel %vm539, 1, 0
    %v556 = vsel %vm540, 1, 0
    %v557 = vsel %vm541, 1, 0
    %v558 = vcvt.s32.f32 %v542
    %v559 = vcvt.s32.f32 %v543
    %v560 = vcvt.s32.f32 %v544
    %v561 = vcvt.s32.f32 %v545
    %v562 = vcvt.s32.f32 %v546
    %v563 = vcvt.s32.f32 %v547
    %v564 = vcvt.s32.f32 %v548
    %v565 = vcvt.s32.f32 %v549
    %v566 = vcvt.s32.f32 %v550
    %v567 = vcvt.s32.f32 %v551
    %v568 = vcvt.s32.f32 %v552
    %v569 = vcvt.s32.f32 %v553
    %v570 = vcvt.s32.f32 %v554
    %v571 = vcvt.s32.f32 %v555
    %v572 = vcvt.s32.f32 %v556
    %v573 = vcvt.s32.f32 %v557
    %574 = vmatprep.subr.mxu0 0.0
    %v575 = vand.u32 %v573, 4294901760
    %576 = vmatpush1.msra.mxu0 %v575
    %577 = vmatprep.subr.mxu0 0.0
    %v578 = vand.u32 %v572, 4294901760
    %579 = vmatpush1.msra.mxu0 %v578
    %580 = vmatprep.subr.mxu0 0.0
    %v581 = vand.u32 %v571, 4294901760
    %582 = vmatpush1.msra.mxu0 %v581
    %583 = vmatprep.subr.mxu0 0.0
    %v584 = vand.u32 %v570, 4294901760
    %585 = vmatpush1.msra.mxu0 %v584
    %586 = vmatprep.subr.mxu0 0.0
    %v587 = vand.u32 %v569, 4294901760
    %588 = vmatpush1.msra.mxu0 %v587
    %589 = vmatprep.subr.mxu0 0.0
    %v590 = vand.u32 %v568, 4294901760
    %591 = vmatpush1.msra.mxu0 %v590
    %592 = vmatprep.subr.mxu0 0.0
    %v593 = vand.u32 %v567, 4294901760
    %594 = vmatpush1.msra.mxu0 %v593
    %595 = vmatprep.subr.mxu0 0.0
    %v596 = vand.u32 %v566, 4294901760
    %597 = vmatpush1.msra.mxu0 %v596
    %598 = vmatprep.subr.mxu0 0.0
    %v599 = vand.u32 %v565, 4294901760
    %600 = vmatpush1.msra.mxu0 %v599
    %601 = vmatprep.subr.mxu0 0.0
    %v602 = vand.u32 %v564, 4294901760
    %603 = vmatpush1.msra.mxu0 %v602
    %604 = vmatprep.subr.mxu0 0.0
    %v605 = vand.u32 %v563, 4294901760
    %606 = vmatpush1.msra.mxu0 %v605
    %607 = vmatprep.subr.mxu0 0.0
    %v608 = vand.u32 %v562, 4294901760
    %609 = vmatpush1.msra.mxu0 %v608
    %610 = vmatprep.subr.mxu0 0.0
    %v611 = vand.u32 %v561, 4294901760
    %612 = vmatpush1.msra.mxu0 %v611
    %613 = vmatprep.subr.mxu0 0.0
    %v614 = vand.u32 %v560, 4294901760
    %615 = vmatpush1.msra.mxu0 %v614
    %616 = vmatprep.subr.mxu0 0.0
    %v617 = vand.u32 %v559, 4294901760
    %618 = vmatpush1.msra.mxu0 %v617
    %619 = vmatprep.subr.mxu0 0.0
    %v620 = vand.u32 %v558, 4294901760
    %621 = vmatpush1.msra.mxu0 %v620
    %622 = vmatprep.subr.mxu0 0.0
    %623 = vmatpush2.msra.mxu0 0.0
    %624 = vmatprep.subr.mxu0 0.0
    %625 = vmatpush2.msra.mxu0 0.0
    %626 = vmatprep.subr.mxu0 0.0
    %627 = vmatpush2.msra.mxu0 0.0
    %628 = vmatprep.subr.mxu0 0.0
    %629 = vmatpush2.msra.mxu0 0.0
    %630 = vmatprep.subr.mxu0 0.0
    %631 = vmatpush2.msra.mxu0 0.0
    %632 = vmatprep.subr.mxu0 0.0
    %633 = vmatpush2.msra.mxu0 0.0
    %634 = vmatprep.subr.mxu0 0.0
    %635 = vmatpush2.msra.mxu0 0.0
    %636 = vmatprep.subr.mxu0 0.0
    %637 = vmatpush2.msra.mxu0 0.0
    %638 = vmatprep.subr.mxu0 0.0
    %639 = vmatpush2.msra.mxu0 0.0
    %640 = vmatprep.subr.mxu0 0.0
    %641 = vmatpush2.msra.mxu0 0.0
    %642 = vmatprep.subr.mxu0 0.0
    %643 = vmatpush2.msra.mxu0 0.0
    %644 = vmatprep.subr.mxu0 0.0
    %645 = vmatpush2.msra.mxu0 0.0
    %646 = vmatprep.subr.mxu0 0.0
    %647 = vmatpush2.msra.mxu0 0.0
    %648 = vmatprep.subr.mxu0 0.0
    %649 = vmatpush2.msra.mxu0 0.0
    %650 = vmatprep.subr.mxu0 0.0
    %651 = vmatpush2.msra.mxu0 0.0
    %652 = vmatprep.subr.mxu0 0.0
    %653 = vmatpush2.msra.mxu0 0.0
    %654 = vmatprep.mubr.f32.mxu0 0.0
    %v655 = vand.u32 %v501, 4294901760
    %v656 = vsub.f32 %v501, %v655
    %v657 = vand.u32 %v656, 4294901760
    %v658 = vsub.f32 %v656, %v657
    %v659 = vand.u32 %v658, 4294901760
    %660 = vmatmul.mubr.f32.gmra.mxu0 %v659
    %v661 = vpop.f32.mrf.mxu0
    %v662 = vadd.f32 0.0, %v661
    %v663 = vpop.f32.mrf.mxu0
    %664 = vdwg.mxu0
    %665 = vmatprep.subr.mxu0 0.0
    %v666 = vand.u32 %v573, 4294901760
    %v667 = vsub.f32 %v573, %v666
    %v668 = vand.u32 %v667, 4294901760
    %v669 = vsub.f32 %v667, %v668
    %v670 = vand.u32 %v669, 4294901760
    %671 = vmatpush1.msra.mxu0 %v670
    %672 = vmatprep.subr.mxu0 0.0
    %v673 = vand.u32 %v572, 4294901760
    %v674 = vsub.f32 %v572, %v673
    %v675 = vand.u32 %v674, 4294901760
    %v676 = vsub.f32 %v674, %v675
    %v677 = vand.u32 %v676, 4294901760
    %678 = vmatpush1.msra.mxu0 %v677
    %679 = vmatprep.subr.mxu0 0.0
    %v680 = vand.u32 %v571, 4294901760
    %v681 = vsub.f32 %v571, %v680
    %v682 = vand.u32 %v681, 4294901760
    %v683 = vsub.f32 %v681, %v682
    %v684 = vand.u32 %v683, 4294901760
    %685 = vmatpush1.msra.mxu0 %v684
    %686 = vmatprep.subr.mxu0 0.0
    %v687 = vand.u32 %v570, 4294901760
    %v688 = vsub.f32 %v570, %v687
    %v689 = vand.u32 %v688, 4294901760
    %v690 = vsub.f32 %v688, %v689
    %v691 = vand.u32 %v690, 4294901760
    %692 = vmatpush1.msra.mxu0 %v691
    %693 = vmatprep.subr.mxu0 0.0
    %v694 = vand.u32 %v569, 4294901760
    %v695 = vsub.f32 %v569, %v694
    %v696 = vand.u32 %v695, 4294901760
    %v697 = vsub.f32 %v695, %v696
    %v698 = vand.u32 %v697, 4294901760
    %699 = vmatpush1.msra.mxu0 %v698
    %700 = vmatprep.subr.mxu0 0.0
    %v701 = vand.u32 %v568, 4294901760
    %v702 = vsub.f32 %v568, %v701
    %v703 = vand.u32 %v702, 4294901760
    %v704 = vsub.f32 %v702, %v703
    %v705 = vand.u32 %v704, 4294901760
    %706 = vmatpush1.msra.mxu0 %v705
    %707 = vmatprep.subr.mxu0 0.0
    %v708 = vand.u32 %v567, 4294901760
    %v709 = vsub.f32 %v567, %v708
    %v710 = vand.u32 %v709, 4294901760
    %v711 = vsub.f32 %v709, %v710
    %v712 = vand.u32 %v711, 4294901760
    %713 = vmatpush1.msra.mxu0 %v712
    %714 = vmatprep.subr.mxu0 0.0
    %v715 = vand.u32 %v566, 4294901760
    %v716 = vsub.f32 %v566, %v715
    %v717 = vand.u32 %v716, 4294901760
    %v718 = vsub.f32 %v716, %v717
    %v719 = vand.u32 %v718, 4294901760
    %720 = vmatpush1.msra.mxu0 %v719
    %721 = vmatprep.subr.mxu0 0.0
    %v722 = vand.u32 %v565, 4294901760
    %v723 = vsub.f32 %v565, %v722
    %v724 = vand.u32 %v723, 4294901760
    %v725 = vsub.f32 %v723, %v724
    %v726 = vand.u32 %v725, 4294901760
    %727 = vmatpush1.msra.mxu0 %v726
    %728 = vmatprep.subr.mxu0 0.0
    %v729 = vand.u32 %v564, 4294901760
    %v730 = vsub.f32 %v564, %v729
    %v731 = vand.u32 %v730, 4294901760
    %v732 = vsub.f32 %v730, %v731
    %v733 = vand.u32 %v732, 4294901760
    %734 = vmatpush1.msra.mxu0 %v733
    %735 = vmatprep.subr.mxu0 0.0
    %v736 = vand.u32 %v563, 4294901760
    %v737 = vsub.f32 %v563, %v736
    %v738 = vand.u32 %v737, 4294901760
    %v739 = vsub.f32 %v737, %v738
    %v740 = vand.u32 %v739, 4294901760
    %741 = vmatpush1.msra.mxu0 %v740
    %742 = vmatprep.subr.mxu0 0.0
    %v743 = vand.u32 %v562, 4294901760
    %v744 = vsub.f32 %v562, %v743
    %v745 = vand.u32 %v744, 4294901760
    %v746 = vsub.f32 %v744, %v745
    %v747 = vand.u32 %v746, 4294901760
    %748 = vmatpush1.msra.mxu0 %v747
    %749 = vmatprep.subr.mxu0 0.0
    %v750 = vand.u32 %v561, 4294901760
    %v751 = vsub.f32 %v561, %v750
    %v752 = vand.u32 %v751, 4294901760
    %v753 = vsub.f32 %v751, %v752
    %v754 = vand.u32 %v753, 4294901760
    %755 = vmatpush1.msra.mxu0 %v754
    %756 = vmatprep.subr.mxu0 0.0
    %v757 = vand.u32 %v560, 4294901760
    %v758 = vsub.f32 %v560, %v757
    %v759 = vand.u32 %v758, 4294901760
    %v760 = vsub.f32 %v758, %v759
    %v761 = vand.u32 %v760, 4294901760
    %762 = vmatpush1.msra.mxu0 %v761
    %763 = vmatprep.subr.mxu0 0.0
    %v764 = vand.u32 %v559, 4294901760
    %v765 = vsub.f32 %v559, %v764
    %v766 = vand.u32 %v765, 4294901760
    %v767 = vsub.f32 %v765, %v766
    %v768 = vand.u32 %v767, 4294901760
    %769 = vmatpush1.msra.mxu0 %v768
    %770 = vmatprep.subr.mxu0 0.0
    %v771 = vand.u32 %v558, 4294901760
    %v772 = vsub.f32 %v558, %v771
    %v773 = vand.u32 %v772, 4294901760
    %v774 = vsub.f32 %v772, %v773
    %v775 = vand.u32 %v774, 4294901760
    %776 = vmatpush1.msra.mxu0 %v775
    %777 = vmatprep.subr.mxu0 0.0
    %778 = vmatpush2.msra.mxu0 0.0
    %779 = vmatprep.subr.mxu0 0.0
    %780 = vmatpush2.msra.mxu0 0.0
    %781 = vmatprep.subr.mxu0 0.0
    %782 = vmatpush2.msra.mxu0 0.0
    %783 = vmatprep.subr.mxu0 0.0
    %784 = vmatpush2.msra.mxu0 0.0
    %785 = vmatprep.subr.mxu0 0.0
    %786 = vmatpush2.msra.mxu0 0.0
    %787 = vmatprep.subr.mxu0 0.0
    %788 = vmatpush2.msra.mxu0 0.0
    %789 = vmatprep.subr.mxu0 0.0
    %790 = vmatpush2.msra.mxu0 0.0
    %791 = vmatprep.subr.mxu0 0.0
    %792 = vmatpush2.msra.mxu0 0.0
    %793 = vmatprep.subr.mxu0 0.0
    %794 = vmatpush2.msra.mxu0 0.0
    %795 = vmatprep.subr.mxu0 0.0
    %796 = vmatpush2.msra.mxu0 0.0
    %797 = vmatprep.subr.mxu0 0.0
    %798 = vmatpush2.msra.mxu0 0.0
    %799 = vmatprep.subr.mxu0 0.0
    %800 = vmatpush2.msra.mxu0 0.0
    %801 = vmatprep.subr.mxu0 0.0
    %802 = vmatpush2.msra.mxu0 0.0
    %803 = vmatprep.subr.mxu0 0.0
    %804 = vmatpush2.msra.mxu0 0.0
    %805 = vmatprep.subr.mxu0 0.0
    %806 = vmatpush2.msra.mxu0 0.0
    %807 = vmatprep.subr.mxu0 0.0
    %808 = vmatpush2.msra.mxu0 0.0
    %809 = vmatprep.mubr.f32.mxu0 0.0
    %v810 = vand.u32 %v501, 4294901760
    %811 = vmatmul.mubr.f32.gmra.mxu0 %v810
    %v812 = vpop.f32.mrf.mxu0
    %v813 = vadd.f32 %v662, %v812
    %v814 = vpop.f32.mrf.mxu0
    %815 = vdwg.mxu0
    %816 = vmatprep.subr.mxu0 0.0
    %v817 = vand.u32 %v573, 4294901760
    %v818 = vsub.f32 %v573, %v817
    %819 = vmatpush1.msra.mxu0 %v818
    %820 = vmatprep.subr.mxu0 0.0
    %v821 = vand.u32 %v572, 4294901760
    %v822 = vsub.f32 %v572, %v821
    %823 = vmatpush1.msra.mxu0 %v822
    %824 = vmatprep.subr.mxu0 0.0
    %v825 = vand.u32 %v571, 4294901760
    %v826 = vsub.f32 %v571, %v825
    %827 = vmatpush1.msra.mxu0 %v826
    %828 = vmatprep.subr.mxu0 0.0
    %v829 = vand.u32 %v570, 4294901760
    %v830 = vsub.f32 %v570, %v829
    %831 = vmatpush1.msra.mxu0 %v830
    %832 = vmatprep.subr.mxu0 0.0
    %v833 = vand.u32 %v569, 4294901760
    %v834 = vsub.f32 %v569, %v833
    %835 = vmatpush1.msra.mxu0 %v834
    %836 = vmatprep.subr.mxu0 0.0
    %v837 = vand.u32 %v568, 4294901760
    %v838 = vsub.f32 %v568, %v837
    %839 = vmatpush1.msra.mxu0 %v838
    %840 = vmatprep.subr.mxu0 0.0
    %v841 = vand.u32 %v567, 4294901760
    %v842 = vsub.f32 %v567, %v841
    %843 = vmatpush1.msra.mxu0 %v842
    %844 = vmatprep.subr.mxu0 0.0
    %v845 = vand.u32 %v566, 4294901760
    %v846 = vsub.f32 %v566, %v845
    %847 = vmatpush1.msra.mxu0 %v846
    %848 = vmatprep.subr.mxu0 0.0
    %v849 = vand.u32 %v565, 4294901760
    %v850 = vsub.f32 %v565, %v849
    %851 = vmatpush1.msra.mxu0 %v850
    %852 = vmatprep.subr.mxu0 0.0
    %v853 = vand.u32 %v564, 4294901760
    %v854 = vsub.f32 %v564, %v853
    %855 = vmatpush1.msra.mxu0 %v854
    %856 = vmatprep.subr.mxu0 0.0
    %v857 = vand.u32 %v563, 4294901760
    %v858 = vsub.f32 %v563, %v857
    %859 = vmatpush1.msra.mxu0 %v858
    %860 = vmatprep.subr.mxu0 0.0
    %v861 = vand.u32 %v562, 4294901760
    %v862 = vsub.f32 %v562, %v861
    %863 = vmatpush1.msra.mxu0 %v862
    %864 = vmatprep.subr.mxu0 0.0
    %v865 = vand.u32 %v561, 4294901760
    %v866 = vsub.f32 %v561, %v865
    %867 = vmatpush1.msra.mxu0 %v866
    %868 = vmatprep.subr.mxu0 0.0
    %v869 = vand.u32 %v560, 4294901760
    %v870 = vsub.f32 %v560, %v869
    %871 = vmatpush1.msra.mxu0 %v870
    %872 = vmatprep.subr.mxu0 0.0
    %v873 = vand.u32 %v559, 4294901760
    %v874 = vsub.f32 %v559, %v873
    %875 = vmatpush1.msra.mxu0 %v874
    %876 = vmatprep.subr.mxu0 0.0
    %v877 = vand.u32 %v558, 4294901760
    %v878 = vsub.f32 %v558, %v877
    %879 = vmatpush1.msra.mxu0 %v878
    %880 = vmatprep.subr.mxu0 0.0
    %881 = vmatpush2.msra.mxu0 0.0
    %882 = vmatprep.subr.mxu0 0.0
    %883 = vmatpush2.msra.mxu0 0.0
    %884 = vmatprep.subr.mxu0 0.0
    %885 = vmatpush2.msra.mxu0 0.0
    %886 = vmatprep.subr.mxu0 0.0
    %887 = vmatpush2.msra.mxu0 0.0
    %888 = vmatprep.subr.mxu0 0.0
    %889 = vmatpush2.msra.mxu0 0.0
    %890 = vmatprep.subr.mxu0 0.0
    %891 = vmatpush2.msra.mxu0 0.0
    %892 = vmatprep.subr.mxu0 0.0
    %893 = vmatpush2.msra.mxu0 0.0
    %894 = vmatprep.subr.mxu0 0.0
    %895 = vmatpush2.msra.mxu0 0.0
    %896 = vmatprep.subr.mxu0 0.0
    %897 = vmatpush2.msra.mxu0 0.0
    %898 = vmatprep.subr.mxu0 0.0
    %899 = vmatpush2.msra.mxu0 0.0
    %900 = vmatprep.subr.mxu0 0.0
    %901 = vmatpush2.msra.mxu0 0.0
    %902 = vmatprep.subr.mxu0 0.0
    %903 = vmatpush2.msra.mxu0 0.0
    %904 = vmatprep.subr.mxu0 0.0
    %905 = vmatpush2.msra.mxu0 0.0
    %906 = vmatprep.subr.mxu0 0.0
    %907 = vmatpush2.msra.mxu0 0.0
    %908 = vmatprep.subr.mxu0 0.0
    %909 = vmatpush2.msra.mxu0 0.0
    %910 = vmatprep.subr.mxu0 0.0
    %911 = vmatpush2.msra.mxu0 0.0
    %912 = vmatprep.mubr.f32.mxu0 0.0
    %v913 = vand.u32 %v501, 4294901760
    %v914 = vsub.f32 %v501, %v913
    %915 = vmatmul.mubr.f32.gmra.mxu0 %v914
    %v916 = vpop.f32.mrf.mxu0
    %v917 = vadd.f32 %v813, %v916
    %v918 = vpop.f32.mrf.mxu0
    %919 = vdwg.mxu0
    %920 = vmatprep.subr.mxu0 0.0
    %v921 = vand.u32 %v573, 4294901760
    %922 = vmatpush1.msra.mxu0 %v921
    %923 = vmatprep.subr.mxu0 0.0
    %v924 = vand.u32 %v572, 4294901760
    %925 = vmatpush1.msra.mxu0 %v924
    %926 = vmatprep.subr.mxu0 0.0
    %v927 = vand.u32 %v571, 4294901760
    %928 = vmatpush1.msra.mxu0 %v927
    %929 = vmatprep.subr.mxu0 0.0
    %v930 = vand.u32 %v570, 4294901760
    %931 = vmatpush1.msra.mxu0 %v930
    %932 = vmatprep.subr.mxu0 0.0
    %v933 = vand.u32 %v569, 4294901760
    %934 = vmatpush1.msra.mxu0 %v933
    %935 = vmatprep.subr.mxu0 0.0
    %v936 = vand.u32 %v568, 4294901760
    %937 = vmatpush1.msra.mxu0 %v936
    %938 = vmatprep.subr.mxu0 0.0
    %v939 = vand.u32 %v567, 4294901760
    %940 = vmatpush1.msra.mxu0 %v939
    %941 = vmatprep.subr.mxu0 0.0
    %v942 = vand.u32 %v566, 4294901760
    %943 = vmatpush1.msra.mxu0 %v942
    %944 = vmatprep.subr.mxu0 0.0
    %v945 = vand.u32 %v565, 4294901760
    %946 = vmatpush1.msra.mxu0 %v945
    %947 = vmatprep.subr.mxu0 0.0
    %v948 = vand.u32 %v564, 4294901760
    %949 = vmatpush1.msra.mxu0 %v948
    %950 = vmatprep.subr.mxu0 0.0
    %v951 = vand.u32 %v563, 4294901760
    %952 = vmatpush1.msra.mxu0 %v951
    %953 = vmatprep.subr.mxu0 0.0
    %v954 = vand.u32 %v562, 4294901760
    %955 = vmatpush1.msra.mxu0 %v954
    %956 = vmatprep.subr.mxu0 0.0
    %v957 = vand.u32 %v561, 4294901760
    %958 = vmatpush1.msra.mxu0 %v957
    %959 = vmatprep.subr.mxu0 0.0
    %v960 = vand.u32 %v560, 4294901760
    %961 = vmatpush1.msra.mxu0 %v960
    %962 = vmatprep.subr.mxu0 0.0
    %v963 = vand.u32 %v559, 4294901760
    %964 = vmatpush1.msra.mxu0 %v963
    %965 = vmatprep.subr.mxu0 0.0
    %v966 = vand.u32 %v558, 4294901760
    %967 = vmatpush1.msra.mxu0 %v966
    %968 = vmatprep.subr.mxu0 0.0
    %969 = vmatpush2.msra.mxu0 0.0
    %970 = vmatprep.subr.mxu0 0.0
    %971 = vmatpush2.msra.mxu0 0.0
    %972 = vmatprep.subr.mxu0 0.0
    %973 = vmatpush2.msra.mxu0 0.0
    %974 = vmatprep.subr.mxu0 0.0
    %975 = vmatpush2.msra.mxu0 0.0
    %976 = vmatprep.subr.mxu0 0.0
    %977 = vmatpush2.msra.mxu0 0.0
    %978 = vmatprep.subr.mxu0 0.0
    %979 = vmatpush2.msra.mxu0 0.0
    %980 = vmatprep.subr.mxu0 0.0
    %981 = vmatpush2.msra.mxu0 0.0
    %982 = vmatprep.subr.mxu0 0.0
    %983 = vmatpush2.msra.mxu0 0.0
    %984 = vmatprep.subr.mxu0 0.0
    %985 = vmatpush2.msra.mxu0 0.0
    %986 = vmatprep.subr.mxu0 0.0
    %987 = vmatpush2.msra.mxu0 0.0
    %988 = vmatprep.subr.mxu0 0.0
    %989 = vmatpush2.msra.mxu0 0.0
    %990 = vmatprep.subr.mxu0 0.0
    %991 = vmatpush2.msra.mxu0 0.0
    %992 = vmatprep.subr.mxu0 0.0
    %993 = vmatpush2.msra.mxu0 0.0
    %994 = vmatprep.subr.mxu0 0.0
    %995 = vmatpush2.msra.mxu0 0.0
    %996 = vmatprep.subr.mxu0 0.0
    %997 = vmatpush2.msra.mxu0 0.0
    %998 = vmatprep.subr.mxu0 0.0
    %999 = vmatpush2.msra.mxu0 0.0
    %1000 = vmatprep.mubr.f32.mxu0 0.0
    %v1001 = vand.u32 %v501, 4294901760
    %v1002 = vsub.f32 %v501, %v1001
    %v1003 = vand.u32 %v1002, 4294901760
    %1004 = vmatmul.mubr.f32.gmra.mxu0 %v1003
    %v1005 = vpop.f32.mrf.mxu0
    %v1006 = vadd.f32 %v917, %v1005
    %v1007 = vpop.f32.mrf.mxu0
    %1008 = vdwg.mxu0
    %1009 = vmatprep.subr.mxu0 0.0
    %v1010 = vand.u32 %v573, 4294901760
    %v1011 = vsub.f32 %v573, %v1010
    %v1012 = vand.u32 %v1011, 4294901760
    %1013 = vmatpush1.msra.mxu0 %v1012
    %1014 = vmatprep.subr.mxu0 0.0
    %v1015 = vand.u32 %v572, 4294901760
    %v1016 = vsub.f32 %v572, %v1015
    %v1017 = vand.u32 %v1016, 4294901760
    %1018 = vmatpush1.msra.mxu0 %v1017
    %1019 = vmatprep.subr.mxu0 0.0
    %v1020 = vand.u32 %v571, 4294901760
    %v1021 = vsub.f32 %v571, %v1020
    %v1022 = vand.u32 %v1021, 4294901760
    %1023 = vmatpush1.msra.mxu0 %v1022
    %1024 = vmatprep.subr.mxu0 0.0
    %v1025 = vand.u32 %v570, 4294901760
    %v1026 = vsub.f32 %v570, %v1025
    %v1027 = vand.u32 %v1026, 4294901760
    %1028 = vmatpush1.msra.mxu0 %v1027
    %1029 = vmatprep.subr.mxu0 0.0
    %v1030 = vand.u32 %v569, 4294901760
    %v1031 = vsub.f32 %v569, %v1030
    %v1032 = vand.u32 %v1031, 4294901760
    %1033 = vmatpush1.msra.mxu0 %v1032
    %1034 = vmatprep.subr.mxu0 0.0
    %v1035 = vand.u32 %v568, 4294901760
    %v1036 = vsub.f32 %v568, %v1035
    %v1037 = vand.u32 %v1036, 4294901760
    %1038 = vmatpush1.msra.mxu0 %v1037
    %1039 = vmatprep.subr.mxu0 0.0
    %v1040 = vand.u32 %v567, 4294901760
    %v1041 = vsub.f32 %v567, %v1040
    %v1042 = vand.u32 %v1041, 4294901760
    %1043 = vmatpush1.msra.mxu0 %v1042
    %1044 = vmatprep.subr.mxu0 0.0
    %v1045 = vand.u32 %v566, 4294901760
    %v1046 = vsub.f32 %v566, %v1045
    %v1047 = vand.u32 %v1046, 4294901760
    %1048 = vmatpush1.msra.mxu0 %v1047
    %1049 = vmatprep.subr.mxu0 0.0
    %v1050 = vand.u32 %v565, 4294901760
    %v1051 = vsub.f32 %v565, %v1050
    %v1052 = vand.u32 %v1051, 4294901760
    %1053 = vmatpush1.msra.mxu0 %v1052
    %1054 = vmatprep.subr.mxu0 0.0
    %v1055 = vand.u32 %v564, 4294901760
    %v1056 = vsub.f32 %v564, %v1055
    %v1057 = vand.u32 %v1056, 4294901760
    %1058 = vmatpush1.msra.mxu0 %v1057
    %1059 = vmatprep.subr.mxu0 0.0
    %v1060 = vand.u32 %v563, 4294901760
    %v1061 = vsub.f32 %v563, %v1060
    %v1062 = vand.u32 %v1061, 4294901760
    %1063 = vmatpush1.msra.mxu0 %v1062
    %1064 = vmatprep.subr.mxu0 0.0
    %v1065 = vand.u32 %v562, 4294901760
    %v1066 = vsub.f32 %v562, %v1065
    %v1067 = vand.u32 %v1066, 4294901760
    %1068 = vmatpush1.msra.mxu0 %v1067
    %1069 = vmatprep.subr.mxu0 0.0
    %v1070 = vand.u32 %v561, 4294901760
    %v1071 = vsub.f32 %v561, %v1070
    %v1072 = vand.u32 %v1071, 4294901760
    %1073 = vmatpush1.msra.mxu0 %v1072
    %1074 = vmatprep.subr.mxu0 0.0
    %v1075 = vand.u32 %v560, 4294901760
    %v1076 = vsub.f32 %v560, %v1075
    %v1077 = vand.u32 %v1076, 4294901760
    %1078 = vmatpush1.msra.mxu0 %v1077
    %1079 = vmatprep.subr.mxu0 0.0
    %v1080 = vand.u32 %v559, 4294901760
    %v1081 = vsub.f32 %v559, %v1080
    %v1082 = vand.u32 %v1081, 4294901760
    %1083 = vmatpush1.msra.mxu0 %v1082
    %1084 = vmatprep.subr.mxu0 0.0
    %v1085 = vand.u32 %v558, 4294901760
    %v1086 = vsub.f32 %v558, %v1085
    %v1087 = vand.u32 %v1086, 4294901760
    %1088 = vmatpush1.msra.mxu0 %v1087
    %1089 = vmatprep.subr.mxu0 0.0
    %1090 = vmatpush2.msra.mxu0 0.0
    %1091 = vmatprep.subr.mxu0 0.0
    %1092 = vmatpush2.msra.mxu0 0.0
    %1093 = vmatprep.subr.mxu0 0.0
    %1094 = vmatpush2.msra.mxu0 0.0
    %1095 = vmatprep.subr.mxu0 0.0
    %1096 = vmatpush2.msra.mxu0 0.0
    %1097 = vmatprep.subr.mxu0 0.0
    %1098 = vmatpush2.msra.mxu0 0.0
    %1099 = vmatprep.subr.mxu0 0.0
    %1100 = vmatpush2.msra.mxu0 0.0
    %1101 = vmatprep.subr.mxu0 0.0
    %1102 = vmatpush2.msra.mxu0 0.0
    %1103 = vmatprep.subr.mxu0 0.0
    %1104 = vmatpush2.msra.mxu0 0.0
    %1105 = vmatprep.subr.mxu0 0.0
    %1106 = vmatpush2.msra.mxu0 0.0
    %1107 = vmatprep.subr.mxu0 0.0
    %1108 = vmatpush2.msra.mxu0 0.0
    %1109 = vmatprep.subr.mxu0 0.0
    %1110 = vmatpush2.msra.mxu0 0.0
    %1111 = vmatprep.subr.mxu0 0.0
    %1112 = vmatpush2.msra.mxu0 0.0
    %1113 = vmatprep.subr.mxu0 0.0
    %1114 = vmatpush2.msra.mxu0 0.0
    %1115 = vmatprep.subr.mxu0 0.0
    %1116 = vmatpush2.msra.mxu0 0.0
    %1117 = vmatprep.subr.mxu0 0.0
    %1118 = vmatpush2.msra.mxu0 0.0
    %1119 = vmatprep.subr.mxu0 0.0
    %1120 = vmatpush2.msra.mxu0 0.0
    %1121 = vmatprep.mubr.f32.mxu0 0.0
    %v1122 = vand.u32 %v501, 4294901760
    %1123 = vmatmul.mubr.f32.gmra.mxu0 %v1122
    %v1124 = vpop.f32.mrf.mxu0
    %v1125 = vadd.f32 %v1006, %v1124
    %v1126 = vpop.f32.mrf.mxu0
    %1127 = vdwg.mxu0
    %1128 = vmatprep.subr.mxu0 0.0
    %v1129 = vand.u32 %v573, 4294901760
    %1130 = vmatpush1.msra.mxu0 %v1129
    %1131 = vmatprep.subr.mxu0 0.0
    %v1132 = vand.u32 %v572, 4294901760
    %1133 = vmatpush1.msra.mxu0 %v1132
    %1134 = vmatprep.subr.mxu0 0.0
    %v1135 = vand.u32 %v571, 4294901760
    %1136 = vmatpush1.msra.mxu0 %v1135
    %1137 = vmatprep.subr.mxu0 0.0
    %v1138 = vand.u32 %v570, 4294901760
    %1139 = vmatpush1.msra.mxu0 %v1138
    %1140 = vmatprep.subr.mxu0 0.0
    %v1141 = vand.u32 %v569, 4294901760
    %1142 = vmatpush1.msra.mxu0 %v1141
    %1143 = vmatprep.subr.mxu0 0.0
    %v1144 = vand.u32 %v568, 4294901760
    %1145 = vmatpush1.msra.mxu0 %v1144
    %1146 = vmatprep.subr.mxu0 0.0
    %v1147 = vand.u32 %v567, 4294901760
    %1148 = vmatpush1.msra.mxu0 %v1147
    %1149 = vmatprep.subr.mxu0 0.0
    %v1150 = vand.u32 %v566, 4294901760
    %1151 = vmatpush1.msra.mxu0 %v1150
    %1152 = vmatprep.subr.mxu0 0.0
    %v1153 = vand.u32 %v565, 4294901760
    %1154 = vmatpush1.msra.mxu0 %v1153
    %1155 = vmatprep.subr.mxu0 0.0
    %v1156 = vand.u32 %v564, 4294901760
    %1157 = vmatpush1.msra.mxu0 %v1156
    %1158 = vmatprep.subr.mxu0 0.0
    %v1159 = vand.u32 %v563, 4294901760
    %1160 = vmatpush1.msra.mxu0 %v1159
    %1161 = vmatprep.subr.mxu0 0.0
    %v1162 = vand.u32 %v562, 4294901760
    %1163 = vmatpush1.msra.mxu0 %v1162
    %1164 = vmatprep.subr.mxu0 0.0
    %v1165 = vand.u32 %v561, 4294901760
    %1166 = vmatpush1.msra.mxu0 %v1165
    %1167 = vmatprep.subr.mxu0 0.0
    %v1168 = vand.u32 %v560, 4294901760
    %1169 = vmatpush1.msra.mxu0 %v1168
    %1170 = vmatprep.subr.mxu0 0.0
    %v1171 = vand.u32 %v559, 4294901760
    %1172 = vmatpush1.msra.mxu0 %v1171
    %1173 = vmatprep.subr.mxu0 0.0
    %v1174 = vand.u32 %v558, 4294901760
    %1175 = vmatpush1.msra.mxu0 %v1174
    %1176 = vmatprep.subr.mxu0 0.0
    %1177 = vmatpush2.msra.mxu0 0.0
    %1178 = vmatprep.subr.mxu0 0.0
    %1179 = vmatpush2.msra.mxu0 0.0
    %1180 = vmatprep.subr.mxu0 0.0
    %1181 = vmatpush2.msra.mxu0 0.0
    %1182 = vmatprep.subr.mxu0 0.0
    %1183 = vmatpush2.msra.mxu0 0.0
    %1184 = vmatprep.subr.mxu0 0.0
    %1185 = vmatpush2.msra.mxu0 0.0
    %1186 = vmatprep.subr.mxu0 0.0
    %1187 = vmatpush2.msra.mxu0 0.0
    %1188 = vmatprep.subr.mxu0 0.0
    %1189 = vmatpush2.msra.mxu0 0.0
    %1190 = vmatprep.subr.mxu0 0.0
    %1191 = vmatpush2.msra.mxu0 0.0
    %1192 = vmatprep.subr.mxu0 0.0
    %1193 = vmatpush2.msra.mxu0 0.0
    %1194 = vmatprep.subr.mxu0 0.0
    %1195 = vmatpush2.msra.mxu0 0.0
    %1196 = vmatprep.subr.mxu0 0.0
    %1197 = vmatpush2.msra.mxu0 0.0
    %1198 = vmatprep.subr.mxu0 0.0
    %1199 = vmatpush2.msra.mxu0 0.0
    %1200 = vmatprep.subr.mxu0 0.0
    %1201 = vmatpush2.msra.mxu0 0.0
    %1202 = vmatprep.subr.mxu0 0.0
    %1203 = vmatpush2.msra.mxu0 0.0
    %1204 = vmatprep.subr.mxu0 0.0
    %1205 = vmatpush2.msra.mxu0 0.0
    %1206 = vmatprep.subr.mxu0 0.0
    %1207 = vmatpush2.msra.mxu0 0.0
    %1208 = vmatprep.mubr.f32.mxu0 0.0
    %v1209 = vand.u32 %v501, 4294901760
    %1210 = vmatmul.mubr.f32.gmra.mxu0 %v1209
    %v1211 = vpop.f32.mrf.mxu0
    %v1212 = vadd.f32 %v1125, %v1211
    %v1213 = vpop.f32.mrf.mxu0
    %1214 = vdwg.mxu0
    %v1215 = vmul.f32 %v1212, %v1212
    %v1216 = vrot.slane %v1215, 4
    %v1217 = vadd.f32 %v1215, %v1216
    %v1218 = vrot.slane %v1217, 2
    %v1219 = vadd.f32 %v1217, %v1218
    %v1220 = vrot.slane %v1219, 1
    %v1221 = vadd.f32 %v1219, %v1220
    %1222 = vst [vmem:[#allocation5] sm:$0x1] %v1221
    // Predicated region
    $region22: #{tpu_custom_call.1} parent=1 // pred_check
      _
    $region23: #{tpu_custom_call.1} parent=1 // pred_check_branch
      %1224 = sbr.rel (0) target = $region25
    $region24: #{tpu_custom_call.1} parent=1 // pred_region
      %s1226 = ssub.s32 16, 16
      %1227 = vsyncadd [#allocation4], %s1226
      %s1229 = sshll.u32 [#allocation5], 4
      %s1230 = int_to_ptr.vmem [resolvable:$true] %s1229
      %1232 = dma.vmem_to_hbm [thread:$0]  %s1230, 16, %s4, [#allocation4]
    $region25: #{tpu_custom_call.1} parent=1 // pred_fallthru
      _
    // Predicated region
    $region26: #{tpu_custom_call.1} parent=1 // pred_check
      _
    $region27: #{tpu_custom_call.1} parent=1 // pred_check_branch
      %1234 = sbr.rel (0) target = $region29
    $region28: #{tpu_custom_call.1} parent=1 // pred_region
      %1235 = dma.done [#allocation4], 16
    $region29: #{tpu_custom_call.1} parent=1 // pred_fallthru
      _
    %1236 = vsyncpa [#allocation3], 1
    %1237 = vsyncpa [#allocation4], 1

</llo_original>
